<compile_context>
chip_gen: v5e
topology: v5e:2x2
jax: 0.10.0
libtpu: 0.0.40
codegen_flags: <defaults>
</compile_context>

<pallas_src>
import jax
import jax.numpy as jnp
from jax.experimental import pallas as pl
from jax.experimental.pallas import tpu as pltpu


def _upsample_kernel(x_ref, w_ref, b_ref, p_ref, o_ref):
    # x_ref: (1, Cin, BH*W)      input rows, channels-first, lane-dense
    # w_ref: (4, Cout, Cin)      weights per (ki,kj) tap, tap index s = 2*ki+kj
    # b_ref: (Cout, 1)           bias (f32)
    # p_ref: (4, BH*W, 4*BH*W)   0/1 pixel-shuffle permutation per tap (f32)
    # o_ref: (1, Cout, 4*BH*W)   output rows in flat NCHW order, lane-dense
    x = x_ref[0]                                              # (Cin, BH*W)
    acc = jnp.zeros(o_ref.shape[1:], dtype=jnp.float32)       # (Cout, 4*BH*W)
    for s in range(4):  # unrolled over the 2x2 taps
        y = jnp.dot(w_ref[s], x,
                    preferred_element_type=jnp.float32)       # (Cout, BH*W)
        acc = acc + jnp.dot(y, p_ref[s],
                            preferred_element_type=jnp.float32)
    o_ref[0] = (acc + b_ref[...]).astype(o_ref.dtype)


def _pick_block_rows(N, H, W):
    """Input image rows processed per grid step.

    BH must divide H, and BH*W must be a multiple of 128 (lane-dense blocks)
    unless BH == H (a full-extent block is always legal).  Prefer the largest
    tile whose permutation matrices stay small and that still leaves >= 4 grid
    steps so both v7x TensorCores get work.
    """
    valid = [bh for bh in range(1, H + 1)
             if H % bh == 0 and ((bh * W) % 128 == 0 or bh == H)]
    # keep the 4 (BH*W, 4*BH*W) f32 permutation matrices under ~8 MiB
    capped = [bh for bh in valid if 16 * (bh * W) ** 2 <= 8 * 1024 * 1024]
    pool = capped if capped else [min(valid)]
    for bh in sorted(pool, reverse=True):
        if N * (H // bh) >= 4:
            return bh
    return min(pool)


def upsample_conv_transpose2d(x_nchw, weight, bias, *, block_rows=None):
    """ConvTranspose2d with kernel_size=2, stride=2 (PyTorch semantics).

    x_nchw : (N, Cin, H, W)
    weight : (Cin, Cout, 2, 2)   -- PyTorch ConvTranspose2d layout
    bias   : (Cout,)
    returns: (N, Cout, 2H, 2W)
    """
    N, Cin, H, W = x_nchw.shape
    Cin_w, Cout, kh, kw = weight.shape
    assert Cin == Cin_w and kh == 2 and kw == 2

    BH = block_rows if block_rows is not None else _pick_block_rows(N, H, W)
    assert H % BH == 0 and ((BH * W) % 128 == 0 or BH == H)
    BHW = BH * W          # input lanes per block
    OL = 4 * BHW          # output lanes per block (= BH rows * 2 * 2W)

    # ---- free (contiguous) reshapes only: no extra HBM layout passes ----
    x3 = x_nchw.reshape(N, Cin, H * W)

    # weight (Cin, Cout, 2, 2) -> (kh*kw, Cout, Cin); tap s = 2*ki + kj
    wf = jnp.transpose(weight, (2, 3, 1, 0)).reshape(4, Cout, Cin)
    b2 = bias.reshape(Cout, 1).astype(jnp.float32)

    # Pixel-shuffle permutation matrices: local input column c = i*W + j maps,
    # for tap (ki,kj), to local output column i*4W + ki*2W + 2j + kj, which is
    # exactly flat NCHW order for output rows (2i+ki) and columns (2j+kj).
    c = jnp.arange(BHW)
    i_loc, j = c // W, c % W
    dst_cols = jnp.arange(OL)[None, :]
    mats = []
    for ki in range(2):
        for kj in range(2):
            dst = i_loc * (4 * W) + ki * (2 * W) + 2 * j + kj
            mats.append((dst[:, None] == dst_cols).astype(jnp.float32))
    perm = jnp.stack(mats)                                   # (4, BHW, OL)

    # VMEM budget: raise the scoped limit only when actually needed.
    itemsize = jnp.dtype(x_nchw.dtype).itemsize
    est_bytes = (2 * (Cin * BHW + Cout * OL) * itemsize      # double-buffered x/out
                 + 2 * 4 * BHW * OL * 4                      # permutation matrices
                 + 4 * Cout * Cin * itemsize + Cout * 4
                 + (1 << 20))                                # headroom
    vmem_limit = None
    if est_bytes > 16 * 1024 * 1024:
        vmem_limit = int(min(max(2 * est_bytes, 32 * 1024 * 1024),
                             64 * 1024 * 1024))

    out3 = pl.pallas_call(
        _upsample_kernel,
        out_shape=jax.ShapeDtypeStruct((N, Cout, 4 * H * W), x_nchw.dtype),
        grid_spec=pltpu.PrefetchScalarGridSpec(
            num_scalar_prefetch=0,
            grid=(N, H // BH),
            in_specs=[
                pl.BlockSpec((1, Cin, BHW), lambda n, t: (n, 0, t)),
                pl.BlockSpec((4, Cout, Cin), lambda n, t: (0, 0, 0)),
                pl.BlockSpec((Cout, 1), lambda n, t: (0, 0)),
                pl.BlockSpec((4, BHW, OL), lambda n, t: (0, 0, 0)),
            ],
            out_specs=pl.BlockSpec((1, Cout, OL), lambda n, t: (n, 0, t)),
        ),
        compiler_params=pltpu.CompilerParams(
            dimension_semantics=("parallel", "parallel"),
            vmem_limit_bytes=vmem_limit),
    )(x3, wf, b2, perm)

    # Contiguous reshape back to NCHW -- a bitcast under jit, not an HBM pass.
    return out3.reshape(N, Cout, 2 * H, 2 * W)


def _reference(x_nchw, weight, bias):
    # out[n, co, 2i+ki, 2j+kj] = sum_ci x[n,ci,i,j] * W[ci,co,ki,kj] + b[co]
    N, Cin, H, W = x_nchw.shape
    _, Cout, kh, kw = weight.shape
    o = jnp.einsum('ncij,cokl->noikjl', x_nchw, weight)      # (N,Cout,H,kh,W,kw)
    o = o.reshape(N, Cout, H * kh, W * kw)
    return o + bias[None, :, None, None]


if __name__ == "__main__":
    key = jax.random.PRNGKey(0)
    k_x, k_w, k_b = jax.random.split(key, 3)

    N, Cin, Cout, H, W = 2, 4, 8, 16, 16
    x = jax.random.normal(k_x, (N, Cin, H, W), dtype=jnp.float32)
    weight = jax.random.normal(k_w, (Cin, Cout, 2, 2), dtype=jnp.float32) * 0.1
    bias = jax.random.normal(k_b, (Cout,), dtype=jnp.float32) * 0.1

    up = jax.jit(upsample_conv_transpose2d)
    out = jax.block_until_ready(up(x, weight, bias))
    ref = _reference(x, weight, bias)

    assert out.shape == (N, Cout, 2 * H, 2 * W), out.shape
    assert jnp.allclose(out, ref, atol=1e-5, rtol=1e-5), \
        float(jnp.max(jnp.abs(out - ref)))
    print("KERNEL_OK")
</pallas_src>

<mosaic_0001>
module attributes {stable_mosaic.version = 11 : i64} {
  func.func @_upsample_kernel(%arg0: i32, %arg1: i32, %arg2: memref<1x4x128xf32, #tpu.memory_space<vmem>>, %arg3: memref<4x8x4xf32, #tpu.memory_space<vmem>>, %arg4: memref<8x1xf32, #tpu.memory_space<vmem>>, %arg5: memref<4x128x512xf32, #tpu.memory_space<vmem>>, %arg6: memref<1x8x512xf32, #tpu.memory_space<vmem>>) attributes {dimension_semantics = [#tpu.dimension_semantics<parallel>, #tpu.dimension_semantics<parallel>], iteration_bounds = array<i64: 2, 2>, scalar_prefetch = 0 : i64, scratch_operands = 0 : i64, tpu.core_type = #tpu.core_type<tc>, window_params = [{transform_indices = @transform_0, window_bounds = array<i64: 1, 4, 128>}, {pipeline_mode = #tpu.pipeline_mode<synchronous>, transform_indices = @transform_1, window_bounds = array<i64: 4, 8, 4>}, {pipeline_mode = #tpu.pipeline_mode<synchronous>, transform_indices = @transform_2, window_bounds = array<i64: 8, 1>}, {pipeline_mode = #tpu.pipeline_mode<synchronous>, transform_indices = @transform_3, window_bounds = array<i64: 4, 128, 512>}, {transform_indices = @transform_4, window_bounds = array<i64: 1, 8, 512>}]} {
    %c0 = arith.constant 0 : index
    %c0_0 = arith.constant 0 : index
    %c0_1 = arith.constant 0 : index
    %0 = vector.load %arg2[%c0, %c0_0, %c0_1] : memref<1x4x128xf32, #tpu.memory_space<vmem>>, vector<1x4x128xf32>
    %1 = vector.shape_cast %0 : vector<1x4x128xf32> to vector<4x128xf32>
    %cst = arith.constant 0.000000e+00 : f32
    %2 = vector.broadcast %cst : f32 to vector<8x512xf32>
    %c0_2 = arith.constant 0 : index
    %c0_3 = arith.constant 0 : index
    %c0_4 = arith.constant 0 : index
    %3 = vector.load %arg3[%c0_2, %c0_3, %c0_4] : memref<4x8x4xf32, #tpu.memory_space<vmem>>, vector<1x8x4xf32>
    %4 = vector.shape_cast %3 : vector<1x8x4xf32> to vector<8x4xf32>
    %cst_5 = arith.constant dense<0.000000e+00> : vector<8x128xf32>
    %5 = tpu.matmul %4, %1, %cst_5 {dimension_numbers = #tpu.dot_dimension_numbers<[1], [0], [0], [1], [0, 0, 1, 1], [], []>} : vector<8x4xf32>, vector<4x128xf32>, vector<8x128xf32> -> vector<8x128xf32>
    %c0_6 = arith.constant 0 : index
    %c0_7 = arith.constant 0 : index
    %c0_8 = arith.constant 0 : index
    %6 = vector.load %arg5[%c0_6, %c0_7, %c0_8] : memref<4x128x512xf32, #tpu.memory_space<vmem>>, vector<1x128x512xf32>
    %7 = vector.shape_cast %6 : vector<1x128x512xf32> to vector<128x512xf32>
    %cst_9 = arith.constant dense<0.000000e+00> : vector<8x512xf32>
    %8 = tpu.matmul %5, %7, %cst_9 {dimension_numbers = #tpu.dot_dimension_numbers<[1], [0], [0], [1], [0, 0, 1, 1], [], []>} : vector<8x128xf32>, vector<128x512xf32>, vector<8x512xf32> -> vector<8x512xf32>
    %9 = arith.addf %2, %8 : vector<8x512xf32>
    %c1 = arith.constant 1 : index
    %c0_10 = arith.constant 0 : index
    %c0_11 = arith.constant 0 : index
    %10 = vector.load %arg3[%c1, %c0_10, %c0_11] : memref<4x8x4xf32, #tpu.memory_space<vmem>>, vector<1x8x4xf32>
    %11 = vector.shape_cast %10 : vector<1x8x4xf32> to vector<8x4xf32>
    %cst_12 = arith.constant dense<0.000000e+00> : vector<8x128xf32>
    %12 = tpu.matmul %11, %1, %cst_12 {dimension_numbers = #tpu.dot_dimension_numbers<[1], [0], [0], [1], [0, 0, 1, 1], [], []>} : vector<8x4xf32>, vector<4x128xf32>, vector<8x128xf32> -> vector<8x128xf32>
    %c1_13 = arith.constant 1 : index
    %c0_14 = arith.constant 0 : index
    %c0_15 = arith.constant 0 : index
    %13 = vector.load %arg5[%c1_13, %c0_14, %c0_15] : memref<4x128x512xf32, #tpu.memory_space<vmem>>, vector<1x128x512xf32>
    %14 = vector.shape_cast %13 : vector<1x128x512xf32> to vector<128x512xf32>
    %cst_16 = arith.constant dense<0.000000e+00> : vector<8x512xf32>
    %15 = tpu.matmul %12, %14, %cst_16 {dimension_numbers = #tpu.dot_dimension_numbers<[1], [0], [0], [1], [0, 0, 1, 1], [], []>} : vector<8x128xf32>, vector<128x512xf32>, vector<8x512xf32> -> vector<8x512xf32>
    %16 = arith.addf %9, %15 : vector<8x512xf32>
    %c2 = arith.constant 2 : index
    %c0_17 = arith.constant 0 : index
    %c0_18 = arith.constant 0 : index
    %17 = vector.load %arg3[%c2, %c0_17, %c0_18] : memref<4x8x4xf32, #tpu.memory_space<vmem>>, vector<1x8x4xf32>
    %18 = vector.shape_cast %17 : vector<1x8x4xf32> to vector<8x4xf32>
    %cst_19 = arith.constant dense<0.000000e+00> : vector<8x128xf32>
    %19 = tpu.matmul %18, %1, %cst_19 {dimension_numbers = #tpu.dot_dimension_numbers<[1], [0], [0], [1], [0, 0, 1, 1], [], []>} : vector<8x4xf32>, vector<4x128xf32>, vector<8x128xf32> -> vector<8x128xf32>
    %c2_20 = arith.constant 2 : index
    %c0_21 = arith.constant 0 : index
    %c0_22 = arith.constant 0 : index
    %20 = vector.load %arg5[%c2_20, %c0_21, %c0_22] : memref<4x128x512xf32, #tpu.memory_space<vmem>>, vector<1x128x512xf32>
    %21 = vector.shape_cast %20 : vector<1x128x512xf32> to vector<128x512xf32>
    %cst_23 = arith.constant dense<0.000000e+00> : vector<8x512xf32>
    %22 = tpu.matmul %19, %21, %cst_23 {dimension_numbers = #tpu.dot_dimension_numbers<[1], [0], [0], [1], [0, 0, 1, 1], [], []>} : vector<8x128xf32>, vector<128x512xf32>, vector<8x512xf32> -> vector<8x512xf32>
    %23 = arith.addf %16, %22 : vector<8x512xf32>
    %c3 = arith.constant 3 : index
    %c0_24 = arith.constant 0 : index
    %c0_25 = arith.constant 0 : index
    %24 = vector.load %arg3[%c3, %c0_24, %c0_25] : memref<4x8x4xf32, #tpu.memory_space<vmem>>, vector<1x8x4xf32>
    %25 = vector.shape_cast %24 : vector<1x8x4xf32> to vector<8x4xf32>
    %cst_26 = arith.constant dense<0.000000e+00> : vector<8x128xf32>
    %26 = tpu.matmul %25, %1, %cst_26 {dimension_numbers = #tpu.dot_dimension_numbers<[1], [0], [0], [1], [0, 0, 1, 1], [], []>} : vector<8x4xf32>, vector<4x128xf32>, vector<8x128xf32> -> vector<8x128xf32>
    %c3_27 = arith.constant 3 : index
    %c0_28 = arith.constant 0 : index
    %c0_29 = arith.constant 0 : index
    %27 = vector.load %arg5[%c3_27, %c0_28, %c0_29] : memref<4x128x512xf32, #tpu.memory_space<vmem>>, vector<1x128x512xf32>
    %28 = vector.shape_cast %27 : vector<1x128x512xf32> to vector<128x512xf32>
    %cst_30 = arith.constant dense<0.000000e+00> : vector<8x512xf32>
    %29 = tpu.matmul %26, %28, %cst_30 {dimension_numbers = #tpu.dot_dimension_numbers<[1], [0], [0], [1], [0, 0, 1, 1], [], []>} : vector<8x128xf32>, vector<128x512xf32>, vector<8x512xf32> -> vector<8x512xf32>
    %30 = arith.addf %23, %29 : vector<8x512xf32>
    %c0_31 = arith.constant 0 : index
    %c0_32 = arith.constant 0 : index
    %31 = vector.load %arg4[%c0_31, %c0_32] : memref<8x1xf32, #tpu.memory_space<vmem>>, vector<8x1xf32>
    %32 = vector.broadcast %31 : vector<8x1xf32> to vector<8x512xf32>
    %33 = arith.addf %30, %32 : vector<8x512xf32>
    %c0_33 = arith.constant 0 : index
    %c0_34 = arith.constant 0 : index
    %c0_35 = arith.constant 0 : index
    %34 = vector.load %arg6[%c0_33, %c0_34, %c0_35] : memref<1x8x512xf32, #tpu.memory_space<vmem>>, vector<1x8x512xf32>
    %35 = vector.shape_cast %34 : vector<1x8x512xf32> to vector<8x512xf32>
    %36 = vector.shape_cast %33 : vector<8x512xf32> to vector<1x8x512xf32>
    tpu.vector_store %arg6[%c0_33, %c0_34, %c0_35], %36 {strides = array<i32>} : memref<1x8x512xf32, #tpu.memory_space<vmem>>, vector<1x8x512xf32>,
    return
  }
  func.func @transform_0(%arg0: i32, %arg1: i32) -> (i32, i32, i32) {
    %c0_i32 = arith.constant 0 : i32
    %c0_i32_0 = arith.constant 0 : i32
    return %arg0, %c0_i32, %arg1 : i32, i32, i32
  }
  func.func @transform_1(%arg0: i32, %arg1: i32) -> (i32, i32, i32) {
    %c0_i32 = arith.constant 0 : i32
    %c0_i32_0 = arith.constant 0 : i32
    %c0_i32_1 = arith.constant 0 : i32
    %c0_i32_2 = arith.constant 0 : i32
    return %c0_i32, %c0_i32_0, %c0_i32_1 : i32, i32, i32
  }
  func.func @transform_2(%arg0: i32, %arg1: i32) -> (i32, i32) {
    %c0_i32 = arith.constant 0 : i32
    %c0_i32_0 = arith.constant 0 : i32
    %c0_i32_1 = arith.constant 0 : i32
    return %c0_i32, %c0_i32_0 : i32, i32
  }
  func.func @transform_3(%arg0: i32, %arg1: i32) -> (i32, i32, i32) {
    %c0_i32 = arith.constant 0 : i32
    %c0_i32_0 = arith.constant 0 : i32
    %c0_i32_1 = arith.constant 0 : i32
    %c0_i32_2 = arith.constant 0 : i32
    return %c0_i32, %c0_i32_0, %c0_i32_1 : i32, i32, i32
  }
  func.func @transform_4(%arg0: i32, %arg1: i32) -> (i32, i32, i32) {
    %c0_i32 = arith.constant 0 : i32
    %c0_i32_0 = arith.constant 0 : i32
    return %arg0, %c0_i32, %arg1 : i32, i32, i32
  }
}

</mosaic_0001>

<llo_original>
// kernel: upsample_conv_transpose2d.1
$region0: #{upsample_conv_transpose2d.1}
  #allocation0 [shape = 'u32[]', space=smem, size = 0x4, offset = 0x4, fixed_abs, tag = 'smem constant byte address 0x4 - core index']
  #allocation1 [shape = 'u32[72,128]{1,0:T(1,128)}', space=vmem, size = 0x9000, scoped, tag = 'internal scratch']
  %s0 = inlined_call_operand.vmem [shape: f32[2,4,256], index: 0, kind: input, shape index: {}]
  %s1 = inlined_call_operand.vmem [shape: f32[4,8,4], index: 1, kind: input, shape index: {}]
  %s2 = inlined_call_operand.vmem [shape: f32[8,1], index: 2, kind: input, shape index: {}]
  %s3 = inlined_call_operand.vmem [shape: f32[4,128,512], index: 3, kind: input, shape index: {}]
  %s4 = inlined_call_operand.vmem [shape: f32[2,8,1024], index: 4, kind: output, shape index: {}]
  %s5 = sld [smem:[#allocation0]]
  $region49: #{upsample_conv_transpose2d.1} parent=0
    _
  %s7 = ssub.s32 1, %s5
  %s8 = scalar_select 0, %s7, %s5
  loop: start=0, step=1, limit=6
  $region2: #{upsample_conv_transpose2d.1} parent=0 // loop_pre_header
    _
  $region3: #{upsample_conv_transpose2d.1} parent=0 // loop_header
    %s10 = sphi 0, %s14
    %p11 = scmp.ge.s32.totalorder %s10, 6
    %s17 = sphi 0, %s29
    %s18 = sphi 0, %s25
    %s19 = sphi 0, %s17
    %s20 = sphi 0, %s18
    %s21 = sphi 0, %s19
    %s22 = sphi 0, %s20
    %s34 = sphi 0, %s36
    %s37 = sphi 0, %s34
    %s38 = sphi 0, %s37
    %s54 = sphi 0, %s38
    %s58 = sphi 0, %s58
    %s60 = sphi 0, %s58
    %s61 = sphi 0, %s60
    %s75 = sphi 0, %s61
    %s79 = sphi 0, %s79
    %s81 = sphi 0, %s79
    %s82 = sphi 0, %s81
    %s96 = sphi 0, %s82
    %s100 = sphi 0, %s100
    %s102 = sphi 0, %s100
    %s103 = sphi 0, %s102
    %s117 = sphi 0, %s103
    %s125 = sphi 0, %s127
    %s128 = sphi 0, %s125
    %s129 = sphi 0, %s128
    %s145 = sphi 0, %s129
  $region4: #{upsample_conv_transpose2d.1} parent=0 // loop_header_branch
    %13 = sbr.rel (%p11) target = $region8
  $region5: #{upsample_conv_transpose2d.1} parent=0 // loop_body
    %s15 = ssub.s32 %s10, 1
    %s16 = ssub.s32 %s10, 2
    %s23 = sadd.s32 1, %s18
    %p24 = scmp.ge.s32.totalorder %s23, 2
    %s25 = scalar_select %p24, 0, %s23
    %s26 = sadd.s32 1, %s17
    %s27 = scalar_select %p24, %s26, %s17
    %p28 = scmp.ge.s32.totalorder %s27, 2
    %s29 = scalar_select %p28, 0, %s27
    %s30 = ssub.s32 %s17, %s29
    %s31 = ssub.s32 %s18, %s25
    %s32 = sor.u32 %s30, %s31
    %p33 = scmp.eq.s32.totalorder %s32, 0
    %s35 = sadd.s32 %s34, 1
    %s36 = scalar_select %p33, %s34, %s35
    %p39 = pneg %p33
    %p40 = scmp.eq.s32.totalorder %s10, 3
    %p41 = por %p39, %p40
    %p42 = scmp.ne.s32.totalorder %s34, %s37
    %p43 = scmp.eq.s32.totalorder %s10, 0
    %p44 = por %p42, %p43
    %p45 = scmp.ne.s32.totalorder %s34, %s37
    %p46 = scmp.eq.s32.totalorder %s15, 3
    %p47 = por %p45, %p46
    %p48 = scmp.ne.s32.totalorder %s37, %s38
    %p49 = scmp.eq.s32.totalorder %s15, 0
    %p50 = por %p48, %p49
    %p51 = scmp.ne.s32.totalorder %s37, %s38
    %p52 = scmp.eq.s32.totalorder %s16, 3
    %p53 = por %p51, %p52
    %p55 = scmp.ne.s32.totalorder %s38, %s54
    %p56 = scmp.eq.s32.totalorder %s16, 0
    %p57 = por %p55, %p56
    %s59 = sadd.s32 %s58, 1
    %p62 = scmp.eq.s32.totalorder %s10, 3
    %p63 = scmp.ne.s32.totalorder %s58, %s60
    %p64 = scmp.eq.s32.totalorder %s10, 0
    %p65 = por %p63, %p64
    %p66 = scmp.ne.s32.totalorder %s58, %s60
    %p67 = scmp.eq.s32.totalorder %s15, 3
    %p68 = por %p66, %p67
    %p69 = scmp.ne.s32.totalorder %s60, %s61
    %p70 = scmp.eq.s32.totalorder %s15, 0
    %p71 = por %p69, %p70
    %p72 = scmp.ne.s32.totalorder %s60, %s61
    %p73 = scmp.eq.s32.totalorder %s16, 3
    %p74 = por %p72, %p73
    %p76 = scmp.ne.s32.totalorder %s61, %s75
    %p77 = scmp.eq.s32.totalorder %s16, 0
    %p78 = por %p76, %p77
    %s80 = sadd.s32 %s79, 1
    %p83 = scmp.eq.s32.totalorder %s10, 3
    %p84 = scmp.ne.s32.totalorder %s79, %s81
    %p85 = scmp.eq.s32.totalorder %s10, 0
    %p86 = por %p84, %p85
    %p87 = scmp.ne.s32.totalorder %s79, %s81
    %p88 = scmp.eq.s32.totalorder %s15, 3
    %p89 = por %p87, %p88
    %p90 = scmp.ne.s32.totalorder %s81, %s82
    %p91 = scmp.eq.s32.totalorder %s15, 0
    %p92 = por %p90, %p91
    %p93 = scmp.ne.s32.totalorder %s81, %s82
    %p94 = scmp.eq.s32.totalorder %s16, 3
    %p95 = por %p93, %p94
    %p97 = scmp.ne.s32.totalorder %s82, %s96
    %p98 = scmp.eq.s32.totalorder %s16, 0
    %p99 = por %p97, %p98
    %s101 = sadd.s32 %s100, 1
    %p104 = scmp.eq.s32.totalorder %s10, 3
    %p105 = scmp.ne.s32.totalorder %s100, %s102
    %p106 = scmp.eq.s32.totalorder %s10, 0
    %p107 = por %p105, %p106
    %p108 = scmp.ne.s32.totalorder %s100, %s102
    %p109 = scmp.eq.s32.totalorder %s15, 3
    %p110 = por %p108, %p109
    %p111 = scmp.ne.s32.totalorder %s102, %s103
    %p112 = scmp.eq.s32.totalorder %s15, 0
    %p113 = por %p111, %p112
    %p114 = scmp.ne.s32.totalorder %s102, %s103
    %p115 = scmp.eq.s32.totalorder %s16, 3
    %p116 = por %p114, %p115
    %p118 = scmp.ne.s32.totalorder %s103, %s117
    %p119 = scmp.eq.s32.totalorder %s16, 0
    %p120 = por %p118, %p119
    %s121 = ssub.s32 %s17, %s29
    %s122 = ssub.s32 %s18, %s25
    %s123 = sor.u32 %s121, %s122
    %p124 = scmp.eq.s32.totalorder %s123, 0
    %s126 = sadd.s32 %s125, 1
    %s127 = scalar_select %p124, %s125, %s126
    %p130 = pneg %p124
    %p131 = scmp.eq.s32.totalorder %s10, 3
    %p132 = por %p130, %p131
    %p133 = scmp.ne.s32.totalorder %s125, %s128
    %p134 = scmp.eq.s32.totalorder %s10, 0
    %p135 = por %p133, %p134
    %p136 = scmp.ne.s32.totalorder %s125, %s128
    %p137 = scmp.eq.s32.totalorder %s15, 3
    %p138 = por %p136, %p137
    %p139 = scmp.ne.s32.totalorder %s128, %s129
    %p140 = scmp.eq.s32.totalorder %s15, 0
    %p141 = por %p139, %p140
    %p142 = scmp.ne.s32.totalorder %s128, %s129
    %p143 = scmp.eq.s32.totalorder %s16, 3
    %p144 = por %p142, %p143
    %p146 = scmp.ne.s32.totalorder %s129, %s145
    %p147 = scmp.eq.s32.totalorder %s16, 0
    %p148 = por %p146, %p147
    %p149 = scmp.le.s32.totalorder 1, %s10
    %p150 = scmp.lt.s32.totalorder %s10, 5
    %p151 = pnand %p149, %p150
    %p152 = pneg %p151
    // Predicated region
    $region9: #{upsample_conv_transpose2d.1} parent=5 // pred_check
      _
    $region10: #{upsample_conv_transpose2d.1} parent=5 // pred_check_branch
      %154 = sbr.rel (%p151) target = $region12
    $region11: #{upsample_conv_transpose2d.1} parent=5 // pred_region
      %s155 = ssub.s32 %s10, 1
      // Predicated region
      $region13: #{upsample_conv_transpose2d.1} parent=11 // pred_check
        %p156 = pneg %p71
      $region14: #{upsample_conv_transpose2d.1} parent=11 // pred_check_branch
        %158 = sbr.rel (%p156) target = $region16
      $region15: #{upsample_conv_transpose2d.1} parent=11 // pred_region
        _
      $region16: #{upsample_conv_transpose2d.1} parent=11 // pred_fallthru
        _
      // Predicated region
      $region17: #{upsample_conv_transpose2d.1} parent=11 // pred_check
        %p159 = pneg %p92
      $region18: #{upsample_conv_transpose2d.1} parent=11 // pred_check_branch
        %161 = sbr.rel (%p159) target = $region20
      $region19: #{upsample_conv_transpose2d.1} parent=11 // pred_region
        _
      $region20: #{upsample_conv_transpose2d.1} parent=11 // pred_fallthru
        _
      // Predicated region
      $region21: #{upsample_conv_transpose2d.1} parent=11 // pred_check
        %p162 = pneg %p113
      $region22: #{upsample_conv_transpose2d.1} parent=11 // pred_check_branch
        %164 = sbr.rel (%p162) target = $region24
      $region23: #{upsample_conv_transpose2d.1} parent=11 // pred_region
        _
      $region24: #{upsample_conv_transpose2d.1} parent=11 // pred_fallthru
        _
    $region12: #{upsample_conv_transpose2d.1} parent=5 // pred_fallthru
      _
    %p165 = scmp.lt.s32.totalorder %s10, 4
    // Predicated region
    $region25: #{upsample_conv_transpose2d.1} parent=5 // pred_check
      %p166 = pneg %p165
    $region26: #{upsample_conv_transpose2d.1} parent=5 // pred_check_branch
      %168 = sbr.rel (%p166) target = $region28
    $region27: #{upsample_conv_transpose2d.1} parent=5 // pred_region
      // Predicated region
      $region29: #{upsample_conv_transpose2d.1} parent=27 // pred_check
        %p169 = pneg %p44
      $region30: #{upsample_conv_transpose2d.1} parent=27 // pred_check_branch
        %171 = sbr.rel (%p169) target = $region32
      $region31: #{upsample_conv_transpose2d.1} parent=27 // pred_region
        %p172 = scmp.lt.s32.totalorder %s17, 1
        %s173 = scalar_select %p172, %s17, 1
        %p174 = scmp.lt.s32.totalorder %s18, 1
        %s175 = scalar_select %p174, %s18, 1
        %s176 = smul.addr %s173, 2
        %s177 = sadd.s32 %s175, %s176
        %s178 = smul.addr %s177, 4
        %s179 = scalar_lea.vmem %s0, %s178
      $region32: #{upsample_conv_transpose2d.1} parent=27 // pred_fallthru
        _
    $region28: #{upsample_conv_transpose2d.1} parent=5 // pred_fallthru
      _
    %p180 = scmp.le.s32.totalorder 1, %s10
    %p181 = scmp.lt.s32.totalorder %s10, 5
    %p182 = pnand %p180, %p181
    %p183 = pneg %p182
    // Predicated region
    $region33: #{upsample_conv_transpose2d.1} parent=5 // pred_check
      _
    $region34: #{upsample_conv_transpose2d.1} parent=5 // pred_check_branch
      %185 = sbr.rel (%p182) target = $region36
    $region35: #{upsample_conv_transpose2d.1} parent=5 // pred_region
      %s186 = ssub.s32 %s10, 1
      %p187 = scmp.lt.s32.totalorder %s19, 1
      %s188 = scalar_select %p187, %s19, 1
      %p189 = scmp.lt.s32.totalorder %s20, 1
      %s190 = scalar_select %p189, %s20, 1
      %s191 = smul.addr %s188, 2
      %s192 = sadd.s32 %s190, %s191
      %s193 = smul.addr %s192, 4
      %s194 = scalar_lea.vmem %s0, %s193
      %p195 = pneg %p50
      %p196 = pneg %p47
      %p197 = pneg %p71
      %p198 = pneg %p68
      %p199 = pneg %p92
      %p200 = pneg %p89
      %p201 = pneg %p113
      %p202 = pneg %p110
      %p203 = pneg %p141
      %p204 = pneg %p138
      %s205 = smul.u32 4, %s20
      %p206 = scmp.lt.s32.totalorder %s19, 1
      %s207 = scalar_select %p206, %s19, 1
      %p208 = scmp.lt.s32.totalorder %s205, 7
      %s209 = scalar_select %p208, %s205, 7
      %s210 = smul.addr %s207, 8
      %s211 = sadd.s32 %s209, %s210
      %s212 = smul.addr %s211, 8
      %s213 = scalar_lea.vmem %s4, %s212
      %p214 = scmp.lt.s32.totalorder %s19, 1
      %s215 = scalar_select %p214, %s19, 1
      %p216 = scmp.lt.s32.totalorder %s20, 1
      %s217 = scalar_select %p216, %s20, 1
      %s218 = smul.addr %s215, 2
      %s219 = sadd.s32 %s217, %s218
      %s220 = smul.addr %s219, 4
      %s221 = scalar_lea.vmem %s0, %s220
      %s222 = smul.u32 4, %s20
      %p223 = scmp.lt.s32.totalorder %s19, 1
      %s224 = scalar_select %p223, %s19, 1
      %p225 = scmp.lt.s32.totalorder %s222, 7
      %s226 = scalar_select %p225, %s222, 7
      %s227 = smul.addr %s224, 8
      %s228 = sadd.s32 %s226, %s227
      %s229 = smul.addr %s228, 8
      %s230 = scalar_lea.vmem %s4, %s229
      %s231 = smul.u32 4, %s20
      %v232 = vld [vmem:[%s221] sm:$0xf]
      %v233 = vld [vmem:[%s1] sm:$0xff]
      %vm234 = vcmask 31744
      %v236 = vsel %vm234, %v233, 0
      %vm238 = vcmask 1043456
      %v240 = vsel %vm238, %v232, 0
      %242 = vmatpush.msra.mxu0 0.0
      %243 = vmatpush.msra.mxu0 0.0
      %244 = vmatpush.msra.mxu0 0.0
      %245 = vmatpush.msra.mxu0 0.0
      %246 = vmatpush.msra.mxu0 0.0
      %247 = vmatpush.msra.mxu0 0.0
      %248 = vmatpush.msra.mxu0 0.0
      %249 = vmatpush.msra.mxu0 0.0
      %250 = vmatpush.msra.mxu0 0.0
      %251 = vmatpush.msra.mxu0 0.0
      %252 = vmatpush.msra.mxu0 0.0
      %253 = vmatpush.msra.mxu0 0.0
      %254 = vmatpush.msra.mxu0 0.0
      %255 = vmatpush.msra.mxu0 0.0
      %256 = vmatpush.msra.mxu0 0.0
      %257 = vmatpush.msra.mxu0 %v240
      %258 = vmatmul.f32.gmra.mxu0 %v236
      %v259 = vpop.f32.mrf.mxu0
      %v260 = vadd.f32 0.0, %v259
      %261 = vdwg.mxu0
      %v262 = vld [vmem:[%s3] sm:$0xff]
      %v263 = vld [vmem:[%s3 + $0x8] sm:$0xff]
      %v264 = vld [vmem:[%s3 + $0x10] sm:$0xff]
      %v265 = vld [vmem:[%s3 + $0x18] sm:$0xff]
      %v266 = vld [vmem:[%s3 + $0x20] sm:$0xff]
      %v267 = vld [vmem:[%s3 + $0x28] sm:$0xff]
      %v268 = vld [vmem:[%s3 + $0x30] sm:$0xff]
      %v269 = vld [vmem:[%s3 + $0x38] sm:$0xff]
      %v270 = vld [vmem:[%s3 + $0x40] sm:$0xff]
      %v271 = vld [vmem:[%s3 + $0x48] sm:$0xff]
      %v272 = vld [vmem:[%s3 + $0x50] sm:$0xff]
      %v273 = vld [vmem:[%s3 + $0x58] sm:$0xff]
      %v274 = vld [vmem:[%s3 + $0x60] sm:$0xff]
      %v275 = vld [vmem:[%s3 + $0x68] sm:$0xff]
      %v276 = vld [vmem:[%s3 + $0x70] sm:$0xff]
      %v277 = vld [vmem:[%s3 + $0x78] sm:$0xff]
      %v278 = vld [vmem:[%s3 + $0x80] sm:$0xff]
      %v279 = vld [vmem:[%s3 + $0x88] sm:$0xff]
      %v280 = vld [vmem:[%s3 + $0x90] sm:$0xff]
      %v281 = vld [vmem:[%s3 + $0x98] sm:$0xff]
      %v282 = vld [vmem:[%s3 + $0xa0] sm:$0xff]
      %v283 = vld [vmem:[%s3 + $0xa8] sm:$0xff]
      %v284 = vld [vmem:[%s3 + $0xb0] sm:$0xff]
      %v285 = vld [vmem:[%s3 + $0xb8] sm:$0xff]
      %v286 = vld [vmem:[%s3 + $0xc0] sm:$0xff]
      %v287 = vld [vmem:[%s3 + $0xc8] sm:$0xff]
      %v288 = vld [vmem:[%s3 + $0xd0] sm:$0xff]
      %v289 = vld [vmem:[%s3 + $0xd8] sm:$0xff]
      %v290 = vld [vmem:[%s3 + $0xe0] sm:$0xff]
      %v291 = vld [vmem:[%s3 + $0xe8] sm:$0xff]
      %v292 = vld [vmem:[%s3 + $0xf0] sm:$0xff]
      %v293 = vld [vmem:[%s3 + $0xf8] sm:$0xff]
      %v294 = vld [vmem:[%s3 + $0x100] sm:$0xff]
      %v295 = vld [vmem:[%s3 + $0x108] sm:$0xff]
      %v296 = vld [vmem:[%s3 + $0x110] sm:$0xff]
      %v297 = vld [vmem:[%s3 + $0x118] sm:$0xff]
      %v298 = vld [vmem:[%s3 + $0x120] sm:$0xff]
      %v299 = vld [vmem:[%s3 + $0x128] sm:$0xff]
      %v300 = vld [vmem:[%s3 + $0x130] sm:$0xff]
      %v301 = vld [vmem:[%s3 + $0x138] sm:$0xff]
      %v302 = vld [vmem:[%s3 + $0x140] sm:$0xff]
      %v303 = vld [vmem:[%s3 + $0x148] sm:$0xff]
      %v304 = vld [vmem:[%s3 + $0x150] sm:$0xff]
      %v305 = vld [vmem:[%s3 + $0x158] sm:$0xff]
      %v306 = vld [vmem:[%s3 + $0x160] sm:$0xff]
      %v307 = vld [vmem:[%s3 + $0x168] sm:$0xff]
      %v308 = vld [vmem:[%s3 + $0x170] sm:$0xff]
      %v309 = vld [vmem:[%s3 + $0x178] sm:$0xff]
      %v310 = vld [vmem:[%s3 + $0x180] sm:$0xff]
      %v311 = vld [vmem:[%s3 + $0x188] sm:$0xff]
      %v312 = vld [vmem:[%s3 + $0x190] sm:$0xff]
      %v313 = vld [vmem:[%s3 + $0x198] sm:$0xff]
      %v314 = vld [vmem:[%s3 + $0x1a0] sm:$0xff]
      %v315 = vld [vmem:[%s3 + $0x1a8] sm:$0xff]
      %v316 = vld [vmem:[%s3 + $0x1b0] sm:$0xff]
      %v317 = vld [vmem:[%s3 + $0x1b8] sm:$0xff]
      %v318 = vld [vmem:[%s3 + $0x1c0] sm:$0xff]
      %v319 = vld [vmem:[%s3 + $0x1c8] sm:$0xff]
      %v320 = vld [vmem:[%s3 + $0x1d0] sm:$0xff]
      %v321 = vld [vmem:[%s3 + $0x1d8] sm:$0xff]
      %v322 = vld [vmem:[%s3 + $0x1e0] sm:$0xff]
      %v323 = vld [vmem:[%s3 + $0x1e8] sm:$0xff]
      %v324 = vld [vmem:[%s3 + $0x1f0] sm:$0xff]
      %v325 = vld [vmem:[%s3 + $0x1f8] sm:$0xff]
      %s326 = scalar_lea.vmem %s1, 8
      %v327 = vld [vmem:[%s326] sm:$0xff]
      %v329 = vsel %vm234, %v327, 0
      %331 = vmatpush.msra.mxu0 0.0
      %332 = vmatpush.msra.mxu0 0.0
      %333 = vmatpush.msra.mxu0 0.0
      %334 = vmatpush.msra.mxu0 0.0
      %335 = vmatpush.msra.mxu0 0.0
      %336 = vmatpush.msra.mxu0 0.0
      %337 = vmatpush.msra.mxu0 0.0
      %338 = vmatpush.msra.mxu0 0.0
      %339 = vmatpush.msra.mxu0 0.0
      %340 = vmatpush.msra.mxu0 0.0
      %341 = vmatpush.msra.mxu0 0.0
      %342 = vmatpush.msra.mxu0 0.0
      %343 = vmatpush.msra.mxu0 0.0
      %344 = vmatpush.msra.mxu0 0.0
      %345 = vmatpush.msra.mxu0 0.0
      %346 = vmatpush.msra.mxu0 %v240
      %347 = vmatmul.f32.gmra.mxu0 %v329
      %v348 = vpop.f32.mrf.mxu0
      %v349 = vadd.f32 0.0, %v348
      %350 = vdwg.mxu0
      %s351 = scalar_lea.vmem %s3, 512
      %v352 = vld [vmem:[%s351] sm:$0xff]
      %v353 = vld [vmem:[%s351 + $0x8] sm:$0xff]
      %v354 = vld [vmem:[%s351 + $0x10] sm:$0xff]
      %v355 = vld [vmem:[%s351 + $0x18] sm:$0xff]
      %v356 = vld [vmem:[%s351 + $0x20] sm:$0xff]
      %v357 = vld [vmem:[%s351 + $0x28] sm:$0xff]
      %v358 = vld [vmem:[%s351 + $0x30] sm:$0xff]
      %v359 = vld [vmem:[%s351 + $0x38] sm:$0xff]
      %v360 = vld [vmem:[%s351 + $0x40] sm:$0xff]
      %v361 = vld [vmem:[%s351 + $0x48] sm:$0xff]
      %v362 = vld [vmem:[%s351 + $0x50] sm:$0xff]
      %v363 = vld [vmem:[%s351 + $0x58] sm:$0xff]
      %v364 = vld [vmem:[%s351 + $0x60] sm:$0xff]
      %v365 = vld [vmem:[%s351 + $0x68] sm:$0xff]
      %v366 = vld [vmem:[%s351 + $0x70] sm:$0xff]
      %v367 = vld [vmem:[%s351 + $0x78] sm:$0xff]
      %v368 = vld [vmem:[%s351 + $0x80] sm:$0xff]
      %v369 = vld [vmem:[%s351 + $0x88] sm:$0xff]
      %v370 = vld [vmem:[%s351 + $0x90] sm:$0xff]
      %v371 = vld [vmem:[%s351 + $0x98] sm:$0xff]
      %v372 = vld [vmem:[%s351 + $0xa0] sm:$0xff]
      %v373 = vld [vmem:[%s351 + $0xa8] sm:$0xff]
      %v374 = vld [vmem:[%s351 + $0xb0] sm:$0xff]
      %v375 = vld [vmem:[%s351 + $0xb8] sm:$0xff]
      %v376 = vld [vmem:[%s351 + $0xc0] sm:$0xff]
      %v377 = vld [vmem:[%s351 + $0xc8] sm:$0xff]
      %v378 = vld [vmem:[%s351 + $0xd0] sm:$0xff]
      %v379 = vld [vmem:[%s351 + $0xd8] sm:$0xff]
      %v380 = vld [vmem:[%s351 + $0xe0] sm:$0xff]
      %v381 = vld [vmem:[%s351 + $0xe8] sm:$0xff]
      %v382 = vld [vmem:[%s351 + $0xf0] sm:$0xff]
      %v383 = vld [vmem:[%s351 + $0xf8] sm:$0xff]
      %v384 = vld [vmem:[%s351 + $0x100] sm:$0xff]
      %v385 = vld [vmem:[%s351 + $0x108] sm:$0xff]
      %v386 = vld [vmem:[%s351 + $0x110] sm:$0xff]
      %v387 = vld [vmem:[%s351 + $0x118] sm:$0xff]
      %v388 = vld [vmem:[%s351 + $0x120] sm:$0xff]
      %v389 = vld [vmem:[%s351 + $0x128] sm:$0xff]
      %v390 = vld [vmem:[%s351 + $0x130] sm:$0xff]
      %v391 = vld [vmem:[%s351 + $0x138] sm:$0xff]
      %v392 = vld [vmem:[%s351 + $0x140] sm:$0xff]
      %v393 = vld [vmem:[%s351 + $0x148] sm:$0xff]
      %v394 = vld [vmem:[%s351 + $0x150] sm:$0xff]
      %v395 = vld [vmem:[%s351 + $0x158] sm:$0xff]
      %v396 = vld [vmem:[%s351 + $0x160] sm:$0xff]
      %v397 = vld [vmem:[%s351 + $0x168] sm:$0xff]
      %v398 = vld [vmem:[%s351 + $0x170] sm:$0xff]
      %v399 = vld [vmem:[%s351 + $0x178] sm:$0xff]
      %v400 = vld [vmem:[%s351 + $0x180] sm:$0xff]
      %v401 = vld [vmem:[%s351 + $0x188] sm:$0xff]
      %v402 = vld [vmem:[%s351 + $0x190] sm:$0xff]
      %v403 = vld [vmem:[%s351 + $0x198] sm:$0xff]
      %v404 = vld [vmem:[%s351 + $0x1a0] sm:$0xff]
      %v405 = vld [vmem:[%s351 + $0x1a8] sm:$0xff]
      %v406 = vld [vmem:[%s351 + $0x1b0] sm:$0xff]
      %v407 = vld [vmem:[%s351 + $0x1b8] sm:$0xff]
      %v408 = vld [vmem:[%s351 + $0x1c0] sm:$0xff]
      %v409 = vld [vmem:[%s351 + $0x1c8] sm:$0xff]
      %v410 = vld [vmem:[%s351 + $0x1d0] sm:$0xff]
      %v411 = vld [vmem:[%s351 + $0x1d8] sm:$0xff]
      %v412 = vld [vmem:[%s351 + $0x1e0] sm:$0xff]
      %v413 = vld [vmem:[%s351 + $0x1e8] sm:$0xff]
      %v414 = vld [vmem:[%s351 + $0x1f0] sm:$0xff]
      %v415 = vld [vmem:[%s351 + $0x1f8] sm:$0xff]
      %416 = vmatpush.msra.mxu0 %v412
      %417 = vmatpush.msra.mxu0 %v408
      %418 = vmatpush.msra.mxu0 %v404
      %419 = vmatpush.msra.mxu0 %v400
      %420 = vmatpush.msra.mxu0 %v396
      %421 = vmatpush.msra.mxu0 %v392
      %422 = vmatpush.msra.mxu0 %v388
      %423 = vmatpush.msra.mxu0 %v384
      %424 = vmatpush.msra.mxu0 %v380
      %425 = vmatpush.msra.mxu0 %v376
      %426 = vmatpush.msra.mxu0 %v372
      %427 = vmatpush.msra.mxu0 %v368
      %428 = vmatpush.msra.mxu0 %v364
      %429 = vmatpush.msra.mxu0 %v360
      %430 = vmatpush.msra.mxu0 %v356
      %431 = vmatpush.msra.mxu0 %v352
      %432 = vmatmul.f32.gmra.mxu0 %v349
      %v433 = vpop.f32.mrf.mxu0
      %v434 = vadd.f32 0.0, %v433
      %435 = vdwg.mxu0
      %436 = vmatpush.msra.mxu0 %v413
      %437 = vmatpush.msra.mxu0 %v409
      %438 = vmatpush.msra.mxu0 %v405
      %439 = vmatpush.msra.mxu0 %v401
      %440 = vmatpush.msra.mxu0 %v397
      %441 = vmatpush.msra.mxu0 %v393
      %442 = vmatpush.msra.mxu0 %v389
      %443 = vmatpush.msra.mxu0 %v385
      %444 = vmatpush.msra.mxu0 %v381
      %445 = vmatpush.msra.mxu0 %v377
      %446 = vmatpush.msra.mxu0 %v373
      %447 = vmatpush.msra.mxu0 %v369
      %448 = vmatpush.msra.mxu0 %v365
      %449 = vmatpush.msra.mxu0 %v361
      %450 = vmatpush.msra.mxu0 %v357
      %451 = vmatpush.msra.mxu0 %v353
      %452 = vmatmul.f32.gmra.mxu0 %v349
      %v453 = vpop.f32.mrf.mxu0
      %v454 = vadd.f32 0.0, %v453
      %455 = vdwg.mxu0
      %456 = vmatpush.msra.mxu0 %v414
      %457 = vmatpush.msra.mxu0 %v410
      %458 = vmatpush.msra.mxu0 %v406
      %459 = vmatpush.msra.mxu0 %v402
      %460 = vmatpush.msra.mxu0 %v398
      %461 = vmatpush.msra.mxu0 %v394
      %462 = vmatpush.msra.mxu0 %v390
      %463 = vmatpush.msra.mxu0 %v386
      %464 = vmatpush.msra.mxu0 %v382
      %465 = vmatpush.msra.mxu0 %v378
      %466 = vmatpush.msra.mxu0 %v374
      %467 = vmatpush.msra.mxu0 %v370
      %468 = vmatpush.msra.mxu0 %v366
      %469 = vmatpush.msra.mxu0 %v362
      %470 = vmatpush.msra.mxu0 %v358
      %471 = vmatpush.msra.mxu0 %v354
      %472 = vmatmul.f32.gmra.mxu0 %v349
      %v473 = vpop.f32.mrf.mxu0
      %v474 = vadd.f32 0.0, %v473
      %475 = vdwg.mxu0
      %476 = vmatpush.msra.mxu0 %v415
      %477 = vmatpush.msra.mxu0 %v411
      %478 = vmatpush.msra.mxu0 %v407
      %479 = vmatpush.msra.mxu0 %v403
      %480 = vmatpush.msra.mxu0 %v399
      %481 = vmatpush.msra.mxu0 %v395
      %482 = vmatpush.msra.mxu0 %v391
      %483 = vmatpush.msra.mxu0 %v387
      %484 = vmatpush.msra.mxu0 %v383
      %485 = vmatpush.msra.mxu0 %v379
      %486 = vmatpush.msra.mxu0 %v375
      %487 = vmatpush.msra.mxu0 %v371
      %488 = vmatpush.msra.mxu0 %v367
      %489 = vmatpush.msra.mxu0 %v363
      %490 = vmatpush.msra.mxu0 %v359
      %491 = vmatpush.msra.mxu0 %v355
      %492 = vmatmul.f32.gmra.mxu0 %v349
      %v493 = vpop.f32.mrf.mxu0
      %v494 = vadd.f32 0.0, %v493
      %495 = vdwg.mxu0
      %496 = vmatpush.msra.mxu0 %v322
      %497 = vmatpush.msra.mxu0 %v318
      %498 = vmatpush.msra.mxu0 %v314
      %499 = vmatpush.msra.mxu0 %v310
      %500 = vmatpush.msra.mxu0 %v306
      %501 = vmatpush.msra.mxu0 %v302
      %502 = vmatpush.msra.mxu0 %v298
      %503 = vmatpush.msra.mxu0 %v294
      %504 = vmatpush.msra.mxu0 %v290
      %505 = vmatpush.msra.mxu0 %v286
      %506 = vmatpush.msra.mxu0 %v282
      %507 = vmatpush.msra.mxu0 %v278
      %508 = vmatpush.msra.mxu0 %v274
      %509 = vmatpush.msra.mxu0 %v270
      %510 = vmatpush.msra.mxu0 %v266
      %511 = vmatpush.msra.mxu0 %v262
      %512 = vmatmul.f32.gmra.mxu0 %v260
      %v513 = vpop.f32.mrf.mxu0
      %v514 = vadd.f32 %v434, %v513
      %515 = vdwg.mxu0
      %516 = vmatpush.msra.mxu0 %v323
      %517 = vmatpush.msra.mxu0 %v319
      %518 = vmatpush.msra.mxu0 %v315
      %519 = vmatpush.msra.mxu0 %v311
      %520 = vmatpush.msra.mxu0 %v307
      %521 = vmatpush.msra.mxu0 %v303
      %522 = vmatpush.msra.mxu0 %v299
      %523 = vmatpush.msra.mxu0 %v295
      %524 = vmatpush.msra.mxu0 %v291
      %525 = vmatpush.msra.mxu0 %v287
      %526 = vmatpush.msra.mxu0 %v283
      %527 = vmatpush.msra.mxu0 %v279
      %528 = vmatpush.msra.mxu0 %v275
      %529 = vmatpush.msra.mxu0 %v271
      %530 = vmatpush.msra.mxu0 %v267
      %531 = vmatpush.msra.mxu0 %v263
      %532 = vmatmul.f32.gmra.mxu0 %v260
      %v533 = vpop.f32.mrf.mxu0
      %v534 = vadd.f32 %v454, %v533
      %535 = vdwg.mxu0
      %536 = vmatpush.msra.mxu0 %v324
      %537 = vmatpush.msra.mxu0 %v320
      %538 = vmatpush.msra.mxu0 %v316
      %539 = vmatpush.msra.mxu0 %v312
      %540 = vmatpush.msra.mxu0 %v308
      %541 = vmatpush.msra.mxu0 %v304
      %542 = vmatpush.msra.mxu0 %v300
      %543 = vmatpush.msra.mxu0 %v296
      %544 = vmatpush.msra.mxu0 %v292
      %545 = vmatpush.msra.mxu0 %v288
      %546 = vmatpush.msra.mxu0 %v284
      %547 = vmatpush.msra.mxu0 %v280
      %548 = vmatpush.msra.mxu0 %v276
      %549 = vmatpush.msra.mxu0 %v272
      %550 = vmatpush.msra.mxu0 %v268
      %551 = vmatpush.msra.mxu0 %v264
      %552 = vmatmul.f32.gmra.mxu0 %v260
      %v553 = vpop.f32.mrf.mxu0
      %v554 = vadd.f32 %v474, %v553
      %555 = vdwg.mxu0
      %556 = vmatpush.msra.mxu0 %v325
      %557 = vmatpush.msra.mxu0 %v321
      %558 = vmatpush.msra.mxu0 %v317
      %559 = vmatpush.msra.mxu0 %v313
      %560 = vmatpush.msra.mxu0 %v309
      %561 = vmatpush.msra.mxu0 %v305
      %562 = vmatpush.msra.mxu0 %v301
      %563 = vmatpush.msra.mxu0 %v297
      %564 = vmatpush.msra.mxu0 %v293
      %565 = vmatpush.msra.mxu0 %v289
      %566 = vmatpush.msra.mxu0 %v285
      %567 = vmatpush.msra.mxu0 %v281
      %568 = vmatpush.msra.mxu0 %v277
      %569 = vmatpush.msra.mxu0 %v273
      %570 = vmatpush.msra.mxu0 %v269
      %571 = vmatpush.msra.mxu0 %v265
      %572 = vmatmul.f32.gmra.mxu0 %v260
      %v573 = vpop.f32.mrf.mxu0
      %v574 = vadd.f32 %v494, %v573
      %575 = vdwg.mxu0
      %s576 = scalar_lea.vmem %s1, 16
      %v577 = vld [vmem:[%s576] sm:$0xff]
      %v579 = vsel %vm234, %v577, 0
      %581 = vmatpush.msra.mxu0 0.0
      %582 = vmatpush.msra.mxu0 0.0
      %583 = vmatpush.msra.mxu0 0.0
      %584 = vmatpush.msra.mxu0 0.0
      %585 = vmatpush.msra.mxu0 0.0
      %586 = vmatpush.msra.mxu0 0.0
      %587 = vmatpush.msra.mxu0 0.0
      %588 = vmatpush.msra.mxu0 0.0
      %589 = vmatpush.msra.mxu0 0.0
      %590 = vmatpush.msra.mxu0 0.0
      %591 = vmatpush.msra.mxu0 0.0
      %592 = vmatpush.msra.mxu0 0.0
      %593 = vmatpush.msra.mxu0 0.0
      %594 = vmatpush.msra.mxu0 0.0
      %595 = vmatpush.msra.mxu0 0.0
      %596 = vmatpush.msra.mxu0 %v240
      %597 = vmatmul.f32.gmra.mxu0 %v579
      %v598 = vpop.f32.mrf.mxu0
      %v599 = vadd.f32 0.0, %v598
      %600 = vdwg.mxu0
      %s601 = scalar_lea.vmem %s3, 1024
      %v602 = vld [vmem:[%s601] sm:$0xff]
      %v603 = vld [vmem:[%s601 + $0x8] sm:$0xff]
      %v604 = vld [vmem:[%s601 + $0x10] sm:$0xff]
      %v605 = vld [vmem:[%s601 + $0x18] sm:$0xff]
      %v606 = vld [vmem:[%s601 + $0x20] sm:$0xff]
      %v607 = vld [vmem:[%s601 + $0x28] sm:$0xff]
      %v608 = vld [vmem:[%s601 + $0x30] sm:$0xff]
      %v609 = vld [vmem:[%s601 + $0x38] sm:$0xff]
      %v610 = vld [vmem:[%s601 + $0x40] sm:$0xff]
      %v611 = vld [vmem:[%s601 + $0x48] sm:$0xff]
      %v612 = vld [vmem:[%s601 + $0x50] sm:$0xff]
      %v613 = vld [vmem:[%s601 + $0x58] sm:$0xff]
      %v614 = vld [vmem:[%s601 + $0x60] sm:$0xff]
      %v615 = vld [vmem:[%s601 + $0x68] sm:$0xff]
      %v616 = vld [vmem:[%s601 + $0x70] sm:$0xff]
      %v617 = vld [vmem:[%s601 + $0x78] sm:$0xff]
      %v618 = vld [vmem:[%s601 + $0x80] sm:$0xff]
      %v619 = vld [vmem:[%s601 + $0x88] sm:$0xff]
      %v620 = vld [vmem:[%s601 + $0x90] sm:$0xff]
      %v621 = vld [vmem:[%s601 + $0x98] sm:$0xff]
      %v622 = vld [vmem:[%s601 + $0xa0] sm:$0xff]
      %v623 = vld [vmem:[%s601 + $0xa8] sm:$0xff]
      %v624 = vld [vmem:[%s601 + $0xb0] sm:$0xff]
      %v625 = vld [vmem:[%s601 + $0xb8] sm:$0xff]
      %v626 = vld [vmem:[%s601 + $0xc0] sm:$0xff]
      %v627 = vld [vmem:[%s601 + $0xc8] sm:$0xff]
      %v628 = vld [vmem:[%s601 + $0xd0] sm:$0xff]
      %v629 = vld [vmem:[%s601 + $0xd8] sm:$0xff]
      %v630 = vld [vmem:[%s601 + $0xe0] sm:$0xff]
      %v631 = vld [vmem:[%s601 + $0xe8] sm:$0xff]
      %v632 = vld [vmem:[%s601 + $0xf0] sm:$0xff]
      %v633 = vld [vmem:[%s601 + $0xf8] sm:$0xff]
      %v634 = vld [vmem:[%s601 + $0x100] sm:$0xff]
      %v635 = vld [vmem:[%s601 + $0x108] sm:$0xff]
      %v636 = vld [vmem:[%s601 + $0x110] sm:$0xff]
      %v637 = vld [vmem:[%s601 + $0x118] sm:$0xff]
      %v638 = vld [vmem:[%s601 + $0x120] sm:$0xff]
      %v639 = vld [vmem:[%s601 + $0x128] sm:$0xff]
      %v640 = vld [vmem:[%s601 + $0x130] sm:$0xff]
      %v641 = vld [vmem:[%s601 + $0x138] sm:$0xff]
      %v642 = vld [vmem:[%s601 + $0x140] sm:$0xff]
      %v643 = vld [vmem:[%s601 + $0x148] sm:$0xff]
      %v644 = vld [vmem:[%s601 + $0x150] sm:$0xff]
      %v645 = vld [vmem:[%s601 + $0x158] sm:$0xff]
      %v646 = vld [vmem:[%s601 + $0x160] sm:$0xff]
      %v647 = vld [vmem:[%s601 + $0x168] sm:$0xff]
      %v648 = vld [vmem:[%s601 + $0x170] sm:$0xff]
      %v649 = vld [vmem:[%s601 + $0x178] sm:$0xff]
      %v650 = vld [vmem:[%s601 + $0x180] sm:$0xff]
      %v651 = vld [vmem:[%s601 + $0x188] sm:$0xff]
      %v652 = vld [vmem:[%s601 + $0x190] sm:$0xff]
      %v653 = vld [vmem:[%s601 + $0x198] sm:$0xff]
      %v654 = vld [vmem:[%s601 + $0x1a0] sm:$0xff]
      %v655 = vld [vmem:[%s601 + $0x1a8] sm:$0xff]
      %v656 = vld [vmem:[%s601 + $0x1b0] sm:$0xff]
      %v657 = vld [vmem:[%s601 + $0x1b8] sm:$0xff]
      %v658 = vld [vmem:[%s601 + $0x1c0] sm:$0xff]
      %v659 = vld [vmem:[%s601 + $0x1c8] sm:$0xff]
      %v660 = vld [vmem:[%s601 + $0x1d0] sm:$0xff]
      %v661 = vld [vmem:[%s601 + $0x1d8] sm:$0xff]
      %v662 = vld [vmem:[%s601 + $0x1e0] sm:$0xff]
      %v663 = vld [vmem:[%s601 + $0x1e8] sm:$0xff]
      %v664 = vld [vmem:[%s601 + $0x1f0] sm:$0xff]
      %v665 = vld [vmem:[%s601 + $0x1f8] sm:$0xff]
      %666 = vmatpush.msra.mxu0 %v662
      %667 = vmatpush.msra.mxu0 %v658
      %668 = vmatpush.msra.mxu0 %v654
      %669 = vmatpush.msra.mxu0 %v650
      %670 = vmatpush.msra.mxu0 %v646
      %671 = vmatpush.msra.mxu0 %v642
      %672 = vmatpush.msra.mxu0 %v638
      %673 = vmatpush.msra.mxu0 %v634
      %674 = vmatpush.msra.mxu0 %v630
      %675 = vmatpush.msra.mxu0 %v626
      %676 = vmatpush.msra.mxu0 %v622
      %677 = vmatpush.msra.mxu0 %v618
      %678 = vmatpush.msra.mxu0 %v614
      %679 = vmatpush.msra.mxu0 %v610
      %680 = vmatpush.msra.mxu0 %v606
      %681 = vmatpush.msra.mxu0 %v602
      %682 = vmatmul.f32.gmra.mxu0 %v599
      %v683 = vpop.f32.mrf.mxu0
      %v684 = vadd.f32 0.0, %v683
      %685 = vdwg.mxu0
      %686 = vmatpush.msra.mxu0 %v663
      %687 = vmatpush.msra.mxu0 %v659
      %688 = vmatpush.msra.mxu0 %v655
      %689 = vmatpush.msra.mxu0 %v651
      %690 = vmatpush.msra.mxu0 %v647
      %691 = vmatpush.msra.mxu0 %v643
      %692 = vmatpush.msra.mxu0 %v639
      %693 = vmatpush.msra.mxu0 %v635
      %694 = vmatpush.msra.mxu0 %v631
      %695 = vmatpush.msra.mxu0 %v627
      %696 = vmatpush.msra.mxu0 %v623
      %697 = vmatpush.msra.mxu0 %v619
      %698 = vmatpush.msra.mxu0 %v615
      %699 = vmatpush.msra.mxu0 %v611
      %700 = vmatpush.msra.mxu0 %v607
      %701 = vmatpush.msra.mxu0 %v603
      %702 = vmatmul.f32.gmra.mxu0 %v599
      %v703 = vpop.f32.mrf.mxu0
      %v704 = vadd.f32 0.0, %v703
      %705 = vdwg.mxu0
      %706 = vmatpush.msra.mxu0 %v664
      %707 = vmatpush.msra.mxu0 %v660
      %708 = vmatpush.msra.mxu0 %v656
      %709 = vmatpush.msra.mxu0 %v652
      %710 = vmatpush.msra.mxu0 %v648
      %711 = vmatpush.msra.mxu0 %v644
      %712 = vmatpush.msra.mxu0 %v640
      %713 = vmatpush.msra.mxu0 %v636
      %714 = vmatpush.msra.mxu0 %v632
      %715 = vmatpush.msra.mxu0 %v628
      %716 = vmatpush.msra.mxu0 %v624
      %717 = vmatpush.msra.mxu0 %v620
      %718 = vmatpush.msra.mxu0 %v616
      %719 = vmatpush.msra.mxu0 %v612
      %720 = vmatpush.msra.mxu0 %v608
      %721 = vmatpush.msra.mxu0 %v604
      %722 = vmatmul.f32.gmra.mxu0 %v599
      %v723 = vpop.f32.mrf.mxu0
      %v724 = vadd.f32 0.0, %v723
      %725 = vdwg.mxu0
      %726 = vmatpush.msra.mxu0 %v665
      %727 = vmatpush.msra.mxu0 %v661
      %728 = vmatpush.msra.mxu0 %v657
      %729 = vmatpush.msra.mxu0 %v653
      %730 = vmatpush.msra.mxu0 %v649
      %731 = vmatpush.msra.mxu0 %v645
      %732 = vmatpush.msra.mxu0 %v641
      %733 = vmatpush.msra.mxu0 %v637
      %734 = vmatpush.msra.mxu0 %v633
      %735 = vmatpush.msra.mxu0 %v629
      %736 = vmatpush.msra.mxu0 %v625
      %737 = vmatpush.msra.mxu0 %v621
      %738 = vmatpush.msra.mxu0 %v617
      %739 = vmatpush.msra.mxu0 %v613
      %740 = vmatpush.msra.mxu0 %v609
      %741 = vmatpush.msra.mxu0 %v605
      %742 = vmatmul.f32.gmra.mxu0 %v599
      %v743 = vpop.f32.mrf.mxu0
      %v744 = vadd.f32 0.0, %v743
      %745 = vdwg.mxu0
      %v746 = vadd.f32 %v514, %v684
      %v747 = vadd.f32 %v534, %v704
      %v748 = vadd.f32 %v554, %v724
      %v749 = vadd.f32 %v574, %v744
      %s750 = scalar_lea.vmem %s1, 24
      %v751 = vld [vmem:[%s750] sm:$0xff]
      %v753 = vsel %vm234, %v751, 0
      %755 = vmatpush.msra.mxu0 0.0
      %756 = vmatpush.msra.mxu0 0.0
      %757 = vmatpush.msra.mxu0 0.0
      %758 = vmatpush.msra.mxu0 0.0
      %759 = vmatpush.msra.mxu0 0.0
      %760 = vmatpush.msra.mxu0 0.0
      %761 = vmatpush.msra.mxu0 0.0
      %762 = vmatpush.msra.mxu0 0.0
      %763 = vmatpush.msra.mxu0 0.0
      %764 = vmatpush.msra.mxu0 0.0
      %765 = vmatpush.msra.mxu0 0.0
      %766 = vmatpush.msra.mxu0 0.0
      %767 = vmatpush.msra.mxu0 0.0
      %768 = vmatpush.msra.mxu0 0.0
      %769 = vmatpush.msra.mxu0 0.0
      %770 = vmatpush.msra.mxu0 %v240
      %771 = vmatmul.f32.gmra.mxu0 %v753
      %v772 = vpop.f32.mrf.mxu0
      %v773 = vadd.f32 0.0, %v772
      %774 = vdwg.mxu0
      %s775 = scalar_lea.vmem %s3, 1536
      %v776 = vld [vmem:[%s775] sm:$0xff]
      %v777 = vld [vmem:[%s775 + $0x8] sm:$0xff]
      %v778 = vld [vmem:[%s775 + $0x10] sm:$0xff]
      %v779 = vld [vmem:[%s775 + $0x18] sm:$0xff]
      %v780 = vld [vmem:[%s775 + $0x20] sm:$0xff]
      %v781 = vld [vmem:[%s775 + $0x28] sm:$0xff]
      %v782 = vld [vmem:[%s775 + $0x30] sm:$0xff]
      %v783 = vld [vmem:[%s775 + $0x38] sm:$0xff]
      %v784 = vld [vmem:[%s775 + $0x40] sm:$0xff]
      %v785 = vld [vmem:[%s775 + $0x48] sm:$0xff]
      %v786 = vld [vmem:[%s775 + $0x50] sm:$0xff]
      %v787 = vld [vmem:[%s775 + $0x58] sm:$0xff]
      %v788 = vld [vmem:[%s775 + $0x60] sm:$0xff]
      %v789 = vld [vmem:[%s775 + $0x68] sm:$0xff]
      %v790 = vld [vmem:[%s775 + $0x70] sm:$0xff]
      %v791 = vld [vmem:[%s775 + $0x78] sm:$0xff]
      %v792 = vld [vmem:[%s775 + $0x80] sm:$0xff]
      %v793 = vld [vmem:[%s775 + $0x88] sm:$0xff]
      %v794 = vld [vmem:[%s775 + $0x90] sm:$0xff]
      %v795 = vld [vmem:[%s775 + $0x98] sm:$0xff]
      %v796 = vld [vmem:[%s775 + $0xa0] sm:$0xff]
      %v797 = vld [vmem:[%s775 + $0xa8] sm:$0xff]
      %v798 = vld [vmem:[%s775 + $0xb0] sm:$0xff]
      %v799 = vld [vmem:[%s775 + $0xb8] sm:$0xff]
      %v800 = vld [vmem:[%s775 + $0xc0] sm:$0xff]
      %v801 = vld [vmem:[%s775 + $0xc8] sm:$0xff]
      %v802 = vld [vmem:[%s775 + $0xd0] sm:$0xff]
      %v803 = vld [vmem:[%s775 + $0xd8] sm:$0xff]
      %v804 = vld [vmem:[%s775 + $0xe0] sm:$0xff]
      %v805 = vld [vmem:[%s775 + $0xe8] sm:$0xff]
      %v806 = vld [vmem:[%s775 + $0xf0] sm:$0xff]
      %v807 = vld [vmem:[%s775 + $0xf8] sm:$0xff]
      %v808 = vld [vmem:[%s775 + $0x100] sm:$0xff]
      %v809 = vld [vmem:[%s775 + $0x108] sm:$0xff]
      %v810 = vld [vmem:[%s775 + $0x110] sm:$0xff]
      %v811 = vld [vmem:[%s775 + $0x118] sm:$0xff]
      %v812 = vld [vmem:[%s775 + $0x120] sm:$0xff]
      %v813 = vld [vmem:[%s775 + $0x128] sm:$0xff]
      %v814 = vld [vmem:[%s775 + $0x130] sm:$0xff]
      %v815 = vld [vmem:[%s775 + $0x138] sm:$0xff]
      %v816 = vld [vmem:[%s775 + $0x140] sm:$0xff]
      %v817 = vld [vmem:[%s775 + $0x148] sm:$0xff]
      %v818 = vld [vmem:[%s775 + $0x150] sm:$0xff]
      %v819 = vld [vmem:[%s775 + $0x158] sm:$0xff]
      %v820 = vld [vmem:[%s775 + $0x160] sm:$0xff]
      %v821 = vld [vmem:[%s775 + $0x168] sm:$0xff]
      %v822 = vld [vmem:[%s775 + $0x170] sm:$0xff]
      %v823 = vld [vmem:[%s775 + $0x178] sm:$0xff]
      %v824 = vld [vmem:[%s775 + $0x180] sm:$0xff]
      %v825 = vld [vmem:[%s775 + $0x188] sm:$0xff]
      %v826 = vld [vmem:[%s775 + $0x190] sm:$0xff]
      %v827 = vld [vmem:[%s775 + $0x198] sm:$0xff]
      %v828 = vld [vmem:[%s775 + $0x1a0] sm:$0xff]
      %v829 = vld [vmem:[%s775 + $0x1a8] sm:$0xff]
      %v830 = vld [vmem:[%s775 + $0x1b0] sm:$0xff]
      %v831 = vld [vmem:[%s775 + $0x1b8] sm:$0xff]
      %v832 = vld [vmem:[%s775 + $0x1c0] sm:$0xff]
      %v833 = vld [vmem:[%s775 + $0x1c8] sm:$0xff]
      %v834 = vld [vmem:[%s775 + $0x1d0] sm:$0xff]
      %v835 = vld [vmem:[%s775 + $0x1d8] sm:$0xff]
      %v836 = vld [vmem:[%s775 + $0x1e0] sm:$0xff]
      %v837 = vld [vmem:[%s775 + $0x1e8] sm:$0xff]
      %v838 = vld [vmem:[%s775 + $0x1f0] sm:$0xff]
      %v839 = vld [vmem:[%s775 + $0x1f8] sm:$0xff]
      %840 = vmatpush.msra.mxu0 %v836
      %841 = vmatpush.msra.mxu0 %v832
      %842 = vmatpush.msra.mxu0 %v828
      %843 = vmatpush.msra.mxu0 %v824
      %844 = vmatpush.msra.mxu0 %v820
      %845 = vmatpush.msra.mxu0 %v816
      %846 = vmatpush.msra.mxu0 %v812
      %847 = vmatpush.msra.mxu0 %v808
      %848 = vmatpush.msra.mxu0 %v804
      %849 = vmatpush.msra.mxu0 %v800
      %850 = vmatpush.msra.mxu0 %v796
      %851 = vmatpush.msra.mxu0 %v792
      %852 = vmatpush.msra.mxu0 %v788
      %853 = vmatpush.msra.mxu0 %v784
      %854 = vmatpush.msra.mxu0 %v780
      %855 = vmatpush.msra.mxu0 %v776
      %856 = vmatmul.f32.gmra.mxu0 %v773
      %v857 = vpop.f32.mrf.mxu0
      %v858 = vadd.f32 0.0, %v857
      %859 = vdwg.mxu0
      %860 = vmatpush.msra.mxu0 %v837
      %861 = vmatpush.msra.mxu0 %v833
      %862 = vmatpush.msra.mxu0 %v829
      %863 = vmatpush.msra.mxu0 %v825
      %864 = vmatpush.msra.mxu0 %v821
      %865 = vmatpush.msra.mxu0 %v817
      %866 = vmatpush.msra.mxu0 %v813
      %867 = vmatpush.msra.mxu0 %v809
      %868 = vmatpush.msra.mxu0 %v805
      %869 = vmatpush.msra.mxu0 %v801
      %870 = vmatpush.msra.mxu0 %v797
      %871 = vmatpush.msra.mxu0 %v793
      %872 = vmatpush.msra.mxu0 %v789
      %873 = vmatpush.msra.mxu0 %v785
      %874 = vmatpush.msra.mxu0 %v781
      %875 = vmatpush.msra.mxu0 %v777
      %876 = vmatmul.f32.gmra.mxu0 %v773
      %v877 = vpop.f32.mrf.mxu0
      %v878 = vadd.f32 0.0, %v877
      %879 = vdwg.mxu0
      %880 = vmatpush.msra.mxu0 %v838
      %881 = vmatpush.msra.mxu0 %v834
      %882 = vmatpush.msra.mxu0 %v830
      %883 = vmatpush.msra.mxu0 %v826
      %884 = vmatpush.msra.mxu0 %v822
      %885 = vmatpush.msra.mxu0 %v818
      %886 = vmatpush.msra.mxu0 %v814
      %887 = vmatpush.msra.mxu0 %v810
      %888 = vmatpush.msra.mxu0 %v806
      %889 = vmatpush.msra.mxu0 %v802
      %890 = vmatpush.msra.mxu0 %v798
      %891 = vmatpush.msra.mxu0 %v794
      %892 = vmatpush.msra.mxu0 %v790
      %893 = vmatpush.msra.mxu0 %v786
      %894 = vmatpush.msra.mxu0 %v782
      %895 = vmatpush.msra.mxu0 %v778
      %896 = vmatmul.f32.gmra.mxu0 %v773
      %v897 = vpop.f32.mrf.mxu0
      %v898 = vadd.f32 0.0, %v897
      %899 = vdwg.mxu0
      %900 = vmatpush.msra.mxu0 %v839
      %901 = vmatpush.msra.mxu0 %v835
      %902 = vmatpush.msra.mxu0 %v831
      %903 = vmatpush.msra.mxu0 %v827
      %904 = vmatpush.msra.mxu0 %v823
      %905 = vmatpush.msra.mxu0 %v819
      %906 = vmatpush.msra.mxu0 %v815
      %907 = vmatpush.msra.mxu0 %v811
      %908 = vmatpush.msra.mxu0 %v807
      %909 = vmatpush.msra.mxu0 %v803
      %910 = vmatpush.msra.mxu0 %v799
      %911 = vmatpush.msra.mxu0 %v795
      %912 = vmatpush.msra.mxu0 %v791
      %913 = vmatpush.msra.mxu0 %v787
      %914 = vmatpush.msra.mxu0 %v783
      %915 = vmatpush.msra.mxu0 %v779
      %916 = vmatmul.f32.gmra.mxu0 %v773
      %v917 = vpop.f32.mrf.mxu0
      %v918 = vadd.f32 0.0, %v917
      %919 = vdwg.mxu0
      %v920 = vadd.f32 %v746, %v858
      %v921 = vadd.f32 %v747, %v878
      %v922 = vadd.f32 %v748, %v898
      %v923 = vadd.f32 %v749, %v918
      %v924 = vld [vmem:[%s2] sm:$0xff]
      %926 = vset.pattern.permute.xlu0 0
      %927 = vperm.xlu0 %926, %v924
      %v928 = vpop.permute.xlu0 %927
      %v930 = vadd.f32 %v920, %v928
      %v931 = vadd.f32 %v921, %v928
      %v932 = vadd.f32 %v922, %v928
      %v933 = vadd.f32 %v923, %v928
      %934 = vst [vmem:[%s230] sm:$0xff] %v930
      %935 = vst [vmem:[%s230 + $0x8] sm:$0xff] %v931
      %936 = vst [vmem:[%s230 + $0x10] sm:$0xff] %v932
      %937 = vst [vmem:[%s230 + $0x18] sm:$0xff] %v933
      %s938 = smul.u32 4, %s20
      %p939 = scmp.lt.s32.totalorder %s19, 1
      %s940 = scalar_select %p939, %s19, 1
      %p941 = scmp.lt.s32.totalorder %s938, 7
      %s942 = scalar_select %p941, %s938, 7
      %s943 = smul.addr %s940, 8
      %s944 = sadd.s32 %s942, %s943
      %s945 = smul.addr %s944, 8
      %s946 = scalar_lea.vmem %s4, %s945
      // Predicated region
      $region37: #{upsample_conv_transpose2d.1} parent=35 // pred_check
        %p947 = pneg %p138
      $region38: #{upsample_conv_transpose2d.1} parent=35 // pred_check_branch
        %949 = sbr.rel (%p947) target = $region40
      $region39: #{upsample_conv_transpose2d.1} parent=35 // pred_region
        %s950 = smul.u32 4, %s20
      $region40: #{upsample_conv_transpose2d.1} parent=35 // pred_fallthru
        _
    $region36: #{upsample_conv_transpose2d.1} parent=5 // pred_fallthru
      _
    %p951 = scmp.le.s32.totalorder 2, %s10
    // Predicated region
    $region41: #{upsample_conv_transpose2d.1} parent=5 // pred_check
      %p952 = pneg %p951
    $region42: #{upsample_conv_transpose2d.1} parent=5 // pred_check_branch
      %954 = sbr.rel (%p952) target = $region44
    $region43: #{upsample_conv_transpose2d.1} parent=5 // pred_region
      %s955 = ssub.s32 %s10, 2
      // Predicated region
      $region45: #{upsample_conv_transpose2d.1} parent=43 // pred_check
        %p956 = pneg %p144
      $region46: #{upsample_conv_transpose2d.1} parent=43 // pred_check_branch
        %958 = sbr.rel (%p956) target = $region48
      $region47: #{upsample_conv_transpose2d.1} parent=43 // pred_region
        %s959 = smul.u32 4, %s22
        %p960 = scmp.lt.s32.totalorder %s21, 1
        %s961 = scalar_select %p960, %s21, 1
        %p962 = scmp.lt.s32.totalorder %s959, 7
        %s963 = scalar_select %p962, %s959, 7
        %s964 = smul.addr %s961, 8
        %s965 = sadd.s32 %s963, %s964
        %s966 = smul.addr %s965, 8
        %s967 = scalar_lea.vmem %s4, %s966
      $region48: #{upsample_conv_transpose2d.1} parent=43 // pred_fallthru
        _
    $region44: #{upsample_conv_transpose2d.1} parent=5 // pred_fallthru
      _
  $region6: #{upsample_conv_transpose2d.1} parent=0 // loop_footer
    %s14 = sadd.s32 1, %s10
  $region7: #{upsample_conv_transpose2d.1} parent=0 // loop_footer_branch
    %9 = sbr.rel target = $region3
  $region8: #{upsample_conv_transpose2d.1} parent=0 // loop_exit
    _

</llo_original>
